<compile_context>
chip_gen: v7x
topology: tpu7x:2x2x1
jax: 0.10.0
libtpu: 0.0.40
codegen_flags: <defaults>
</compile_context>

<pallas_src>
import functools
import math

import jax
import jax.numpy as jnp
from jax.experimental import pallas as pl
from jax.experimental.pallas import tpu as pltpu


def _round_up(x, m):
    return ((x + m - 1) // m) * m


def _rbf_kernel(d_ref, o_ref, *, num_centers, pack, c_start, c_step,
                neg_inv_two_width_sq, exp_in_bf16):
    # d_ref: (T, P)    f32 packed distances (P per output row)
    # o_ref: (T, P*C)  output; lanes [p*C, (p+1)*C) hold the RBF of d[:, p]
    w = pack * num_centers
    lane = jax.lax.broadcasted_iota(jnp.int32, (1, w), 1)            # (1, w)
    # Centers baked in-kernel (no DMA stream): start + (lane % C) * step.
    c = c_start + (lane % num_centers).astype(jnp.float32) * c_step  # (1, w)

    d = d_ref[...]                                                   # (T, P)
    d_full = d[:, 0:1]                                               # (T, 1)
    for p in range(1, pack):
        d_full = jnp.where(lane >= p * num_centers, d[:, p:p + 1], d_full)

    diff = d_full - c                                                # (T, w)
    # exp((+/-inf)^2 * neg_k) = exp(-inf) = 0 -> masked_fill(isinf) implicit;
    # NaN propagates the same as in the PyTorch reference.
    arg = (diff * diff) * neg_inv_two_width_sq
    if exp_in_bf16:
        arg = arg.astype(jnp.bfloat16)
    o_ref[...] = jnp.exp(arg).astype(o_ref.dtype)


def rbf_encoding(distances, num_centers=64, cutoff=10.0, tile_rows=8192,
                 out_dtype=jnp.float32, exp_in_bf16=False):
    """Pallas equivalent of RBFEncoding.forward.

    distances:   float array of any shape.
    out_dtype:   jnp.float32 (exact PyTorch semantics) or jnp.bfloat16
                 (halved HBM store traffic; opt-in, changes numerics).
    exp_in_bf16: compute the exp argument in bf16 (EUP relief on v6e/v7x;
                 leave False on v5e or when exact f32 numerics are needed).
    returns:     array of shape distances.shape + (num_centers,).
    """
    distances = jnp.asarray(distances, jnp.float32)
    orig_shape = distances.shape
    full_out_shape = orig_shape + (num_centers,)
    n = math.prod(orig_shape)
    if n == 0:
        return jnp.zeros(full_out_shape, out_dtype)

    # Buffers exactly as in the PyTorch __init__ (analytic width -> jit-safe;
    # ~1 ULP from float32(centers[1]-centers[0]), negligible in the output).
    c_start = 0.01 * cutoff
    c_step = (0.99 - 0.01) * cutoff / (num_centers - 1) if num_centers > 1 else 0.0
    width = c_step
    neg_inv_two_width_sq = -1.0 / (2.0 * width * width)

    # Packing factor: P distances per output row so row width is a multiple of
    # 128 lanes whenever possible (P=2 for the default C=64).
    if num_centers % 128 == 0:
        pack = 1
    elif 128 % num_centers == 0:
        pack = 128 // num_centers
    else:
        pack = 1  # correct; stores masked (perf only)
    row_width = pack * num_centers

    # Flatten and pack P distances per row (pad up to P-1 elements if needed).
    flat = distances.reshape(-1)
    n_pad = _round_up(n, pack)
    if n_pad != n:
        flat = jnp.pad(flat, (0, n_pad - n))
    n_rows = n_pad // pack
    d_packed = flat.reshape(n_rows, pack)

    # Row tile: store-bound -> big blocks; but keep >= 4 grid blocks for large
    # inputs so both v7x TensorCores get work via the "parallel" axis.
    t = min(tile_rows, n_rows)
    if n_rows >= 2048:
        t = min(t, _round_up(-(-n_rows // 4), 8))
    if t != n_rows:
        t = max(8, (t // 8) * 8)
    grid = (pl.cdiv(n_rows, t),)

    # VMEM accounting (double-buffered).  The (t, P) input block is padded to
    # 128 lanes in VMEM -> t*128*4 bytes per buffer, as big as a 128-wide f32
    # output block.
    out_itemsize = jnp.dtype(out_dtype).itemsize
    in_block_bytes = t * 128 * 4
    out_block_bytes = t * _round_up(row_width, 128) * out_itemsize
    vmem_need = 2 * (in_block_bytes + out_block_bytes)
    vmem_limit = int(min(96 << 20, max(32 << 20, vmem_need + (4 << 20))))

    kernel = functools.partial(
        _rbf_kernel,
        num_centers=num_centers,
        pack=pack,
        c_start=float(c_start),
        c_step=float(c_step),
        neg_inv_two_width_sq=float(neg_inv_two_width_sq),
        exp_in_bf16=bool(exp_in_bf16),
    )

    out2 = pl.pallas_call(
        kernel,
        out_shape=jax.ShapeDtypeStruct((n_rows, row_width), out_dtype),
        grid_spec=pltpu.PrefetchScalarGridSpec(
            num_scalar_prefetch=0,
            grid=grid,
            in_specs=[pl.BlockSpec((t, pack), lambda i: (i, 0))],
            out_specs=pl.BlockSpec((t, row_width), lambda i: (i, 0)),
        ),
        compiler_params=pltpu.CompilerParams(
            dimension_semantics=("parallel",),
            vmem_limit_bytes=vmem_limit,
        ),
        cost_estimate=pl.CostEstimate(
            flops=int(3 * n_pad * num_centers),
            transcendentals=int(n_pad * num_centers),
            bytes_accessed=int(n_pad * 4 + n_pad * num_centers * out_itemsize),
        ),
    )(d_packed)

    # (n_rows, P*C) row-major == (n_pad, C) row-major: contiguous reshape.
    out_flat = out2.reshape(n_pad, num_centers)
    if n_pad != n:
        out_flat = out_flat[:n]
    return out_flat.reshape(full_out_shape)


def rbf_encoding_ref(distances, num_centers=64, cutoff=10.0):
    """Pure-JAX reference mirroring the PyTorch module."""
    centers = jnp.linspace(cutoff * 0.01, cutoff * 0.99, num_centers,
                           dtype=jnp.float32)
    width = centers[1] - centers[0]
    d = distances[..., None]
    rbf = jnp.exp(-(d - centers) ** 2 / (2.0 * width ** 2))
    return jnp.where(jnp.isinf(d), 0.0, rbf)


if __name__ == "__main__":
    key = jax.random.PRNGKey(0)
    # Small shape consistent with the forward (pairwise distances B, N, N).
    B, N = 2, 8
    distances = jax.random.uniform(key, (B, N, N), dtype=jnp.float32,
                                   minval=0.0, maxval=12.0)
    # Exercise the masked_fill(inf) path.
    distances = distances.at[0, 0, 0].set(jnp.inf)
    distances = distances.at[1, 3, 5].set(jnp.inf)

    ref = rbf_encoding_ref(distances)

    # 1) f32 path (exact module semantics).
    out = jax.block_until_ready(rbf_encoding(distances))
    assert out.shape == (B, N, N, 64), out.shape
    assert out.dtype == jnp.float32
    assert jnp.allclose(out, ref, atol=5e-5, rtol=1e-4), \
        float(jnp.max(jnp.abs(out - ref)))

    # 2) Odd element count (pad/tail path) + multi-block grid with a ragged
    #    last block (tiny tile override).
    d_small = jax.random.uniform(jax.random.PRNGKey(1), (5, 5),
                                 dtype=jnp.float32, minval=0.0, maxval=12.0)
    out_s = jax.block_until_ready(rbf_encoding(d_small, tile_rows=8))
    ref_s = rbf_encoding_ref(d_small)
    assert out_s.shape == (5, 5, 64), out_s.shape
    assert jnp.allclose(out_s, ref_s, atol=5e-5, rtol=1e-4), \
        float(jnp.max(jnp.abs(out_s - ref_s)))

    # 3) Opt-in bf16 output path (halved store traffic; looser tolerance).
    out_bf = jax.block_until_ready(
        rbf_encoding(distances, out_dtype=jnp.bfloat16, exp_in_bf16=True))
    assert out_bf.shape == (B, N, N, 64), out_bf.shape
    assert out_bf.dtype == jnp.bfloat16
    assert jnp.allclose(out_bf.astype(jnp.float32), ref, atol=3e-2), \
        float(jnp.max(jnp.abs(out_bf.astype(jnp.float32) - ref)))

    print("KERNEL_OK")
</pallas_src>

<mosaic_0001>
module attributes {stable_mosaic.version = 11 : i64} {
  func.func @_rbf_kernel(%arg0: i32, %arg1: memref<64x2xf32, #tpu.memory_space<vmem>>, %arg2: memref<64x128xf32, #tpu.memory_space<vmem>>) attributes {dimension_semantics = [#tpu.dimension_semantics<parallel>], iteration_bounds = array<i64: 1>, scalar_prefetch = 0 : i64, scratch_operands = 0 : i64, tpu.core_type = #tpu.core_type<tc>, window_params = [{transform_indices = @transform_0, window_bounds = array<i64: 64, 2>}, {transform_indices = @transform_1, window_bounds = array<i64: 64, 128>}]} {
    %0 = tpu.iota {dimensions = array<i32: 1>} : vector<1x128xi32>
    %c64_i32 = arith.constant 64 : i32
    %c0_i32 = arith.constant 0 : i32
    %1 = arith.cmpi eq, %c64_i32, %c0_i32 : i32
    %c1_i32 = arith.constant 1 : i32
    %2 = arith.select %1, %c1_i32, %c64_i32 : i32
    %3 = vector.broadcast %2 : i32 to vector<1x128xi32>
    %4 = arith.remsi %0, %3 : vector<1x128xi32>
    %c0_i32_0 = arith.constant 0 : i32
    %5 = vector.broadcast %c0_i32_0 : i32 to vector<1x128xi32>
    %6 = arith.cmpi ne, %4, %5 : vector<1x128xi32>
    %c0_i32_1 = arith.constant 0 : i32
    %7 = vector.broadcast %c0_i32_1 : i32 to vector<1x128xi32>
    %8 = arith.cmpi slt, %4, %7 : vector<1x128xi32>
    %c0_i32_2 = arith.constant 0 : i32
    %9 = arith.cmpi slt, %2, %c0_i32_2 : i32
    %10 = vector.broadcast %9 : i1 to vector<1x128xi1>
    %11 = vector.broadcast %10 : vector<1x128xi1> to vector<1x128xi1>
    %12 = arith.xori %8, %11 : vector<1x128xi1>
    %13 = arith.andi %12, %6 : vector<1x128xi1>
    %14 = vector.broadcast %2 : i32 to vector<1x128xi32>
    %15 = arith.addi %4, %14 : vector<1x128xi32>
    %16 = arith.select %13, %15, %4 : vector<1x128xi1>, vector<1x128xi32>
    %17 = arith.sitofp %16 : vector<1x128xi32> to vector<1x128xf32>
    %cst = arith.constant 0.155555561 : f32
    %18 = vector.broadcast %cst : f32 to vector<1x128xf32>
    %19 = arith.mulf %17, %18 : vector<1x128xf32>
    %cst_3 = arith.constant 1.000000e-01 : f32
    %20 = vector.broadcast %cst_3 : f32 to vector<1x128xf32>
    %21 = arith.addf %20, %19 : vector<1x128xf32>
    %c0 = arith.constant 0 : index
    %c0_4 = arith.constant 0 : index
    %22 = vector.load %arg1[%c0, %c0_4] : memref<64x2xf32, #tpu.memory_space<vmem>>, vector<64x2xf32>
    %23 = vector.extract_strided_slice %22 {offsets = [0, 0], sizes = [64, 1], strides = [1, 1]} : vector<64x2xf32> to vector<64x1xf32>
    %c64_i32_5 = arith.constant 64 : i32
    %24 = vector.broadcast %c64_i32_5 : i32 to vector<1x128xi32>
    %25 = arith.cmpi sge, %0, %24 : vector<1x128xi32>
    %26 = vector.extract_strided_slice %22 {offsets = [0, 1], sizes = [64, 1], strides = [1, 1]} : vector<64x2xf32> to vector<64x1xf32>
    %27 = vector.shape_cast %25 : vector<1x128xi1> to vector<1x128xi1>
    %28 = vector.broadcast %27 : vector<1x128xi1> to vector<64x128xi1>
    %29 = vector.shape_cast %26 : vector<64x1xf32> to vector<64x1xf32>
    %30 = vector.broadcast %29 : vector<64x1xf32> to vector<64x128xf32>
    %31 = vector.shape_cast %23 : vector<64x1xf32> to vector<64x1xf32>
    %32 = vector.broadcast %31 : vector<64x1xf32> to vector<64x128xf32>
    %33 = arith.select %28, %30, %32 : vector<64x128xi1>, vector<64x128xf32>
    %34 = vector.broadcast %21 : vector<1x128xf32> to vector<64x128xf32>
    %35 = arith.subf %33, %34 : vector<64x128xf32>
    %36 = arith.mulf %35, %35 : vector<64x128xf32>
    %cst_6 = arith.constant -20.6632652 : f32
    %37 = vector.broadcast %cst_6 : f32 to vector<64x128xf32>
    %38 = arith.mulf %36, %37 : vector<64x128xf32>
    %39 = math.exp %38 : vector<64x128xf32>
    %c0_7 = arith.constant 0 : index
    %c0_8 = arith.constant 0 : index
    %40 = vector.load %arg2[%c0_7, %c0_8] : memref<64x128xf32, #tpu.memory_space<vmem>>, vector<64x128xf32>
    tpu.vector_store %arg2[%c0_7, %c0_8], %39 {strides = array<i32>} : memref<64x128xf32, #tpu.memory_space<vmem>>, vector<64x128xf32>,
    return
  }
  func.func @transform_0(%arg0: i32) -> (i32, i32) {
    %c0_i32 = arith.constant 0 : i32
    %c0_i32_0 = arith.constant 0 : i32
    return %arg0, %c0_i32 : i32, i32
  }
  func.func @transform_1(%arg0: i32) -> (i32, i32) {
    %c0_i32 = arith.constant 0 : i32
    %c0_i32_0 = arith.constant 0 : i32
    return %arg0, %c0_i32 : i32, i32
  }
}

</mosaic_0001>

<llo_original>
// kernel: tpu_custom_call.1
$region0: #{tpu_custom_call.1}
  #allocation0 [shape = 'u32[]', space=smem, size = 0x4, offset = 0x4, fixed_abs, tag = 'smem constant byte address 0x4 - core index']
  #allocation1 [shape = 'u32[144,128]{1,0:T(1,128)}', space=vmem, size = 0x12000, scoped, tag = 'internal scratch']
  %s0 = inlined_call_operand.vmem [shape: f32[64,2], index: 0, kind: input, shape index: {}]
  %s1 = inlined_call_operand.hbm [shape: f32[64,128], index: 1, kind: output, shape index: {}]
  %s2 = sld [smem:[#allocation0]]
  $region14: #{tpu_custom_call.1} parent=0
    _
  %s4 = ssub.s32 1, %s2
  %s5 = scalar_select 0, %s4, %s2
  $region1: #{tpu_custom_call.1} parent=0
    #allocation2 [shape = 'u8[32768]{0}', space=vmem, size = 0x8000, scoped, tag = 'output window, operand 0, single buffered']
    #allocation3 [shape = 's32[1]{0}', space=sflag, size = 0x4, scoped, tag = 'scoped memory for tpu_custom_call.1']
    %6 = vsyncpa [#allocation3], 0
    // Predicated region
    $region2: #{tpu_custom_call.1} parent=1 // pred_check
      _
    $region3: #{tpu_custom_call.1} parent=1 // pred_check_branch
      %8 = sbr.rel (0) target = $region5
    $region4: #{tpu_custom_call.1} parent=1 // pred_region
      _
    $region5: #{tpu_custom_call.1} parent=1 // pred_fallthru
      _
    %v9 = vlaneseq
    %v10 = vand.u32 %v9, 127
    %vm11 = vcmp.lt.s32.totalorder %v10, 0
    %v12 = vsub.s32 0, %v10
    %v13 = vsel %vm11, %v12, %v10
    %v14 = vshrl.u32 %v13, 6
    %v15 = vand.u32 %v13, 63
    %v16 = vsub.s32 0, %v15
    %v17 = vsel %vm11, %v16, %v15
    %vm18 = vcmp.ne.s32.totalorder %v17, 0
    %vm19 = vcmp.lt.s32.totalorder %v17, 0
    %vm20 = vmand %vm19, %vm18
    %v21 = vadd.s32 %v17, 64
    %v22 = vsel %vm20, %v21, %v17
    %v23 = vcvt.s32.f32 %v22
    %v24 = vmul.f32 %v23, 0.15555556
    %v25 = vadd.f32 %v24, 0.1
    %v26 = vld [vmem:[%s0] sm:$0xff]
    %v27 = vld [vmem:[%s0 + $0x8] sm:$0xff]
    %v28 = vld [vmem:[%s0 + $0x10] sm:$0xff]
    %v29 = vld [vmem:[%s0 + $0x18] sm:$0xff]
    %v30 = vld [vmem:[%s0 + $0x20] sm:$0xff]
    %v31 = vld [vmem:[%s0 + $0x28] sm:$0xff]
    %v32 = vld [vmem:[%s0 + $0x30] sm:$0xff]
    %v33 = vld [vmem:[%s0 + $0x38] sm:$0xff]
    %vm34 = vcmp.ge.s32.totalorder %v10, 64
    %v35 = vsel %vm34, 1, 0
    %vm36 = vcmp.eq.s32.totalorder %v35, 1
    %38 = vset.pattern.permute.xlu0 1
    %39 = vperm.xlu0 %38, %v26
    %v40 = vpop.permute.xlu0 %39
    %43 = vset.pattern.permute.xlu0 1
    %44 = vperm.xlu0 %43, %v27
    %v45 = vpop.permute.xlu0 %44
    %48 = vset.pattern.permute.xlu0 1
    %49 = vperm.xlu0 %48, %v28
    %v50 = vpop.permute.xlu0 %49
    %53 = vset.pattern.permute.xlu0 1
    %54 = vperm.xlu0 %53, %v29
    %v55 = vpop.permute.xlu0 %54
    %58 = vset.pattern.permute.xlu0 1
    %59 = vperm.xlu0 %58, %v30
    %v60 = vpop.permute.xlu0 %59
    %63 = vset.pattern.permute.xlu0 1
    %64 = vperm.xlu0 %63, %v31
    %v65 = vpop.permute.xlu0 %64
    %68 = vset.pattern.permute.xlu0 1
    %69 = vperm.xlu0 %68, %v32
    %v70 = vpop.permute.xlu0 %69
    %73 = vset.pattern.permute.xlu0 1
    %74 = vperm.xlu0 %73, %v33
    %v75 = vpop.permute.xlu0 %74
    %77 = vset.pattern.permute.xlu0 0
    %78 = vperm.xlu0 %77, %v26
    %v79 = vpop.permute.xlu0 %78
    %81 = vset.pattern.permute.xlu0 0
    %82 = vperm.xlu0 %81, %v27
    %v83 = vpop.permute.xlu0 %82
    %85 = vset.pattern.permute.xlu0 0
    %86 = vperm.xlu0 %85, %v28
    %v87 = vpop.permute.xlu0 %86
    %89 = vset.pattern.permute.xlu0 0
    %90 = vperm.xlu0 %89, %v29
    %v91 = vpop.permute.xlu0 %90
    %93 = vset.pattern.permute.xlu0 0
    %94 = vperm.xlu0 %93, %v30
    %v95 = vpop.permute.xlu0 %94
    %97 = vset.pattern.permute.xlu0 0
    %98 = vperm.xlu0 %97, %v31
    %v99 = vpop.permute.xlu0 %98
    %101 = vset.pattern.permute.xlu0 0
    %102 = vperm.xlu0 %101, %v32
    %v103 = vpop.permute.xlu0 %102
    %105 = vset.pattern.permute.xlu0 0
    %106 = vperm.xlu0 %105, %v33
    %v107 = vpop.permute.xlu0 %106
    %v109 = vsel %vm36, %v40, %v79
    %v110 = vsel %vm36, %v45, %v83
    %v111 = vsel %vm36, %v50, %v87
    %v112 = vsel %vm36, %v55, %v91
    %v113 = vsel %vm36, %v60, %v95
    %v114 = vsel %vm36, %v65, %v99
    %v115 = vsel %vm36, %v70, %v103
    %v116 = vsel %vm36, %v75, %v107
    %v117 = vsub.f32 %v109, %v25
    %v118 = vsub.f32 %v110, %v25
    %v119 = vsub.f32 %v111, %v25
    %v120 = vsub.f32 %v112, %v25
    %v121 = vsub.f32 %v113, %v25
    %v122 = vsub.f32 %v114, %v25
    %v123 = vsub.f32 %v115, %v25
    %v124 = vsub.f32 %v116, %v25
    %v125 = vmul.f32 %v117, %v117
    %v126 = vmul.f32 %v118, %v118
    %v127 = vmul.f32 %v119, %v119
    %v128 = vmul.f32 %v120, %v120
    %v129 = vmul.f32 %v121, %v121
    %v130 = vmul.f32 %v122, %v122
    %v131 = vmul.f32 %v123, %v123
    %v132 = vmul.f32 %v124, %v124
    %v133 = vmul.f32 %v125, -20.663265
    %v134 = vmul.f32 %v126, -20.663265
    %v135 = vmul.f32 %v127, -20.663265
    %v136 = vmul.f32 %v128, -20.663265
    %v137 = vmul.f32 %v129, -20.663265
    %v138 = vmul.f32 %v130, -20.663265
    %v139 = vmul.f32 %v131, -20.663265
    %v140 = vmul.f32 %v132, -20.663265
    %v141 = vmul.f32 %v133, 1.442695
    %v142 = vpow.pop %v141
    %v143 = vmul.f32 %v134, 1.442695
    %v144 = vpow.pop %v143
    %v145 = vmul.f32 %v135, 1.442695
    %v146 = vpow.pop %v145
    %v147 = vmul.f32 %v136, 1.442695
    %v148 = vpow.pop %v147
    %v149 = vmul.f32 %v137, 1.442695
    %v150 = vpow.pop %v149
    %v151 = vmul.f32 %v138, 1.442695
    %v152 = vpow.pop %v151
    %v153 = vmul.f32 %v139, 1.442695
    %v154 = vpow.pop %v153
    %v155 = vmul.f32 %v140, 1.442695
    %v156 = vpow.pop %v155
    %157 = vst [vmem:[#allocation2] sm:$0xff] %v142
    %158 = vst [vmem:[#allocation2 + $0x8] sm:$0xff] %v144
    %159 = vst [vmem:[#allocation2 + $0x10] sm:$0xff] %v146
    %160 = vst [vmem:[#allocation2 + $0x18] sm:$0xff] %v148
    %161 = vst [vmem:[#allocation2 + $0x20] sm:$0xff] %v150
    %162 = vst [vmem:[#allocation2 + $0x28] sm:$0xff] %v152
    %163 = vst [vmem:[#allocation2 + $0x30] sm:$0xff] %v154
    %164 = vst [vmem:[#allocation2 + $0x38] sm:$0xff] %v156
    // Predicated region
    $region6: #{tpu_custom_call.1} parent=1 // pred_check
      _
    $region7: #{tpu_custom_call.1} parent=1 // pred_check_branch
      %166 = sbr.rel (0) target = $region9
    $region8: #{tpu_custom_call.1} parent=1 // pred_region
      %s168 = ssub.s32 1024, 1024
      %169 = vsyncadd [#allocation3], %s168
      %s170 = sshll.u32 [#allocation2], 4
      %s171 = int_to_ptr.vmem [resolvable:$true] %s170
      %176 = dma.vmem_to_hbm [thread:$0]  %s171, 1024, %s1, [#allocation3], 128, 128, 8
    $region9: #{tpu_custom_call.1} parent=1 // pred_fallthru
      _
    // Predicated region
    $region10: #{tpu_custom_call.1} parent=1 // pred_check
      _
    $region11: #{tpu_custom_call.1} parent=1 // pred_check_branch
      %178 = sbr.rel (0) target = $region13
    $region12: #{tpu_custom_call.1} parent=1 // pred_region
      %179 = dma.done [#allocation3], 1024
    $region13: #{tpu_custom_call.1} parent=1 // pred_fallthru
      _
    %180 = vsyncpa [#allocation3], 1

</llo_original>
